<compile_context>
chip_gen: v5e
topology: v5e:2x2
jax: 0.10.0
libtpu: 0.0.40
codegen_flags: <defaults>
</compile_context>

<pallas_src>
import jax
import jax.numpy as jnp
from jax.experimental import pallas as pl
from jax.experimental.pallas import tpu as pltpu


def _qa_head_kernel(x_ref, w_ref, b_ref, out_ref):
    # x_ref:   (TM, H)   row tile of the flattened sequence output
    # w_ref:   (H, 2)    full weight (qa_outputs.weight transposed), VMEM-resident
    # b_ref:   (1, 2)    bias, VMEM-resident
    # out_ref: (TM, 2)   logits tile
    acc = jnp.dot(x_ref[...], w_ref[...], preferred_element_type=jnp.float32)
    out_ref[...] = (acc + b_ref[...].astype(jnp.float32)).astype(out_ref.dtype)


def _choose_tile_m(n_rows, hidden, itemsize):
    """Largest row tile that (a) amortizes per-grid-step overhead and
    (b) keeps the double-buffered x stream well under 32 MiB scoped VMEM
    (safe on v5e / v6e / v7x)."""
    granule = 16 if itemsize == 2 else 8      # bf16 packs (16,128); f32 (8,128)
    budget = 20 * 1024 * 1024                 # bytes for 2 x-tile buffers
    tile_m = budget // (2 * hidden * itemsize)
    tile_m = int(min(tile_m, 1024))           # 512-1024 rows is the sweet spot
    if tile_m >= n_rows:
        # Single block covering every row; block dim == array dim is always legal.
        return n_rows
    return max(granule, (tile_m // granule) * granule)


def qa_head_forward(sequence_output, weight, bias, *, tile_m=None):
    """sequence_output: [B, S, H]; weight: [2, H] (PyTorch layout); bias: [2].

    Returns (start_logits, end_logits), each [B, S].
    """
    B, S, H = sequence_output.shape
    N = B * S
    x = sequence_output.reshape(N, H)
    itemsize = jnp.dtype(sequence_output.dtype).itemsize

    if tile_m is None:
        tile_m = _choose_tile_m(N, H, itemsize)
    tile_m = min(tile_m, N)

    w = weight.T                  # [H, 2]
    b = bias.reshape(1, 2)        # [1, 2]

    # No host-side padding: ragged last row-block is handled by the cdiv grid
    # (out-of-bounds output rows are clipped by Pallas, never materialized).
    grid = (pl.cdiv(N, tile_m),)

    # Advisory cost hint so XLA schedules neighbors around this mem-bound call.
    cost = pl.CostEstimate(
        flops=2 * N * H * 2,
        transcendentals=0,
        bytes_accessed=N * H * itemsize + N * 2 * itemsize + (H * 2 + 2) * itemsize,
    )

    logits = pl.pallas_call(
        _qa_head_kernel,
        out_shape=jax.ShapeDtypeStruct((N, 2), sequence_output.dtype),
        grid_spec=pltpu.PrefetchScalarGridSpec(
            num_scalar_prefetch=0,
            grid=grid,
            in_specs=[
                pl.BlockSpec((tile_m, H), lambda i: (i, 0)),   # streamed x tile
                pl.BlockSpec((H, 2), lambda i: (0, 0)),        # weight, stays resident
                pl.BlockSpec((1, 2), lambda i: (0, 0)),        # bias, stays resident
            ],
            out_specs=pl.BlockSpec((tile_m, 2), lambda i: (i, 0)),
        ),
        compiler_params=pltpu.CompilerParams(
            dimension_semantics=("parallel",),       # row grid shards across v7x's 2 TCs
            vmem_limit_bytes=32 * 1024 * 1024,       # lift v5e's 16 MiB default; safe on v7x
        ),
        cost_estimate=cost,
    )(x, w, b)

    logits = logits.reshape(B, S, 2)
    start_logits = logits[..., 0]
    end_logits = logits[..., 1]
    return start_logits, end_logits


def _ref_forward(sequence_output, weight, bias):
    logits = jnp.einsum("bsh,oh->bso", sequence_output, weight) + bias
    return logits[..., 0], logits[..., 1]


if __name__ == "__main__":
    B, S, H = 2, 8, 32

    key = jax.random.PRNGKey(0)
    kx, kw, kb = jax.random.split(key, 3)

    sequence_output = jax.random.normal(kx, (B, S, H), dtype=jnp.float32)
    # "Linear(hidden_size, 2)" parameters (PyTorch layout: [out, in]).
    weight = jax.random.normal(kw, (2, H), dtype=jnp.float32) * (1.0 / jnp.sqrt(H))
    bias = jax.random.normal(kb, (2,), dtype=jnp.float32) * 0.01

    start_logits, end_logits = qa_head_forward(sequence_output, weight, bias)
    start_logits = jax.block_until_ready(start_logits)
    end_logits = jax.block_until_ready(end_logits)

    ref_start, ref_end = _ref_forward(sequence_output, weight, bias)
    assert start_logits.shape == (B, S) and end_logits.shape == (B, S)
    assert jnp.allclose(start_logits, ref_start, atol=1e-5, rtol=1e-5)
    assert jnp.allclose(end_logits, ref_end, atol=1e-5, rtol=1e-5)

    print("KERNEL_OK")
</pallas_src>

<mosaic_0001>
module attributes {stable_mosaic.version = 11 : i64} {
  func.func @_qa_head_kernel(%arg0: i32, %arg1: memref<16x32xf32, #tpu.memory_space<vmem>>, %arg2: memref<32x2xf32, #tpu.memory_space<vmem>>, %arg3: memref<1x2xf32, #tpu.memory_space<vmem>>, %arg4: memref<16x2xf32, #tpu.memory_space<vmem>>) attributes {dimension_semantics = [#tpu.dimension_semantics<parallel>], iteration_bounds = array<i64: 1>, scalar_prefetch = 0 : i64, scratch_operands = 0 : i64, tpu.core_type = #tpu.core_type<tc>, window_params = [{transform_indices = @transform_0, window_bounds = array<i64: 16, 32>}, {pipeline_mode = #tpu.pipeline_mode<synchronous>, transform_indices = @transform_1, window_bounds = array<i64: 32, 2>}, {pipeline_mode = #tpu.pipeline_mode<synchronous>, transform_indices = @transform_2, window_bounds = array<i64: 1, 2>}, {transform_indices = @transform_3, window_bounds = array<i64: 16, 2>}]} {
    %c0 = arith.constant 0 : index
    %c0_0 = arith.constant 0 : index
    %0 = vector.load %arg1[%c0, %c0_0] : memref<16x32xf32, #tpu.memory_space<vmem>>, vector<16x32xf32>
    %c0_1 = arith.constant 0 : index
    %c0_2 = arith.constant 0 : index
    %1 = vector.load %arg2[%c0_1, %c0_2] : memref<32x2xf32, #tpu.memory_space<vmem>>, vector<32x2xf32>
    %cst = arith.constant dense<0.000000e+00> : vector<16x2xf32>
    %2 = tpu.matmul %0, %1, %cst {dimension_numbers = #tpu.dot_dimension_numbers<[1], [0], [0], [1], [0, 0, 1, 1], [], []>} : vector<16x32xf32>, vector<32x2xf32>, vector<16x2xf32> -> vector<16x2xf32>
    %c0_3 = arith.constant 0 : index
    %c0_4 = arith.constant 0 : index
    %3 = vector.load %arg3[%c0_3, %c0_4] : memref<1x2xf32, #tpu.memory_space<vmem>>, vector<1x2xf32>
    %4 = vector.broadcast %3 : vector<1x2xf32> to vector<16x2xf32>
    %5 = arith.addf %2, %4 : vector<16x2xf32>
    %c0_5 = arith.constant 0 : index
    %c0_6 = arith.constant 0 : index
    %6 = vector.load %arg4[%c0_5, %c0_6] : memref<16x2xf32, #tpu.memory_space<vmem>>, vector<16x2xf32>
    tpu.vector_store %arg4[%c0_5, %c0_6], %5 {strides = array<i32>} : memref<16x2xf32, #tpu.memory_space<vmem>>, vector<16x2xf32>,
    return
  }
  func.func @transform_0(%arg0: i32) -> (i32, i32) {
    %c0_i32 = arith.constant 0 : i32
    %c0_i32_0 = arith.constant 0 : i32
    return %arg0, %c0_i32 : i32, i32
  }
  func.func @transform_1(%arg0: i32) -> (i32, i32) {
    %c0_i32 = arith.constant 0 : i32
    %c0_i32_0 = arith.constant 0 : i32
    %c0_i32_1 = arith.constant 0 : i32
    return %c0_i32, %c0_i32_0 : i32, i32
  }
  func.func @transform_2(%arg0: i32) -> (i32, i32) {
    %c0_i32 = arith.constant 0 : i32
    %c0_i32_0 = arith.constant 0 : i32
    %c0_i32_1 = arith.constant 0 : i32
    return %c0_i32, %c0_i32_0 : i32, i32
  }
  func.func @transform_3(%arg0: i32) -> (i32, i32) {
    %c0_i32 = arith.constant 0 : i32
    %c0_i32_0 = arith.constant 0 : i32
    return %arg0, %c0_i32 : i32, i32
  }
}

</mosaic_0001>

<llo_original>
// kernel: tpu_custom_call.1
$region0: #{tpu_custom_call.1}
  #allocation0 [shape = 'u32[]', space=smem, size = 0x4, offset = 0x4, fixed_abs, tag = 'smem constant byte address 0x4 - core index']
  #allocation1 [shape = 'u32[72,128]{1,0:T(1,128)}', space=vmem, size = 0x9000, scoped, tag = 'internal scratch']
  %s0 = inlined_call_operand.vmem [shape: f32[16,32], index: 0, kind: input, shape index: {}]
  %s1 = inlined_call_operand.vmem [shape: f32[32,2], index: 1, kind: input, shape index: {}]
  %s2 = inlined_call_operand.vmem [shape: f32[1,2], index: 2, kind: input, shape index: {}]
  %s3 = inlined_call_operand.vmem [shape: f32[16,2], index: 3, kind: output, shape index: {}]
  %s4 = sld [smem:[#allocation0]]
  $region22: #{tpu_custom_call.1} parent=0
    _
  %s6 = ssub.s32 1, %s4
  %s7 = scalar_select 0, %s6, %s4
  // Predicated region
  $region2: #{tpu_custom_call.1} parent=0 // pred_check
    _
  $region3: #{tpu_custom_call.1} parent=0 // pred_check_branch
    %9 = sbr.rel (0) target = $region5
  $region4: #{tpu_custom_call.1} parent=0 // pred_region
    _
  $region5: #{tpu_custom_call.1} parent=0 // pred_fallthru
    _
  // Predicated region
  $region6: #{tpu_custom_call.1} parent=0 // pred_check
    _
  $region7: #{tpu_custom_call.1} parent=0 // pred_check_branch
    %11 = sbr.rel (0) target = $region9
  $region8: #{tpu_custom_call.1} parent=0 // pred_region
    _
  $region9: #{tpu_custom_call.1} parent=0 // pred_fallthru
    _
  // Predicated region
  $region10: #{tpu_custom_call.1} parent=0 // pred_check
    _
  $region11: #{tpu_custom_call.1} parent=0 // pred_check_branch
    %13 = sbr.rel (0) target = $region13
  $region12: #{tpu_custom_call.1} parent=0 // pred_region
    _
  $region13: #{tpu_custom_call.1} parent=0 // pred_fallthru
    _
  %v14 = vld [vmem:[%s0] sm:$0xff]
  %v15 = vld [vmem:[%s0 + $0x8] sm:$0xff]
  %v16 = vld [vmem:[%s1] sm:$0xff]
  %v17 = vld [vmem:[%s1 + $0x8] sm:$0xff]
  %v18 = vld [vmem:[%s1 + $0x10] sm:$0xff]
  %v19 = vld [vmem:[%s1 + $0x18] sm:$0xff]
  %v20 = vld [vmem:[%s2] sm:$0x1]
  %v22 = vperm.slane %v20, 0
  %vm24 = vcmask 261120
  %v26 = vsel %vm24, %v14, 0
  %v29 = vsel %vm24, %v15, 0
  %31 = vmatpush.msra.mxu0 0.0
  %32 = vmatpush.msra.mxu0 0.0
  %33 = vmatpush.msra.mxu0 0.0
  %34 = vmatpush.msra.mxu0 0.0
  %35 = vmatpush.msra.mxu0 0.0
  %36 = vmatpush.msra.mxu0 0.0
  %37 = vmatpush.msra.mxu0 0.0
  %38 = vmatpush.msra.mxu0 0.0
  %39 = vmatpush.msra.mxu0 0.0
  %40 = vmatpush.msra.mxu0 0.0
  %41 = vmatpush.msra.mxu0 0.0
  %42 = vmatpush.msra.mxu0 0.0
  %43 = vmatpush.msra.mxu0 %v19
  %44 = vmatpush.msra.mxu0 %v18
  %45 = vmatpush.msra.mxu0 %v17
  %46 = vmatpush.msra.mxu0 %v16
  %47 = vmatmul.f32.gmra.mxu0 %v26
  %v48 = vpop.f32.mrf.mxu0
  %v49 = vadd.f32 %v22, %v48
  %50 = vmatmul.f32.gmra.mxu0 %v29
  %v51 = vpop.f32.mrf.mxu0
  %v52 = vadd.f32 %v22, %v51
  %53 = vdwg.mxu0
  %vm54 = vcmask 15360
  %55 = vst.msk [vmem:[%s3] sm:$0xff] %vm54, %v49
  %56 = vst.msk [vmem:[%s3 + $0x8] sm:$0xff] %vm54, %v52
  // Predicated region
  $region14: #{tpu_custom_call.1} parent=0 // pred_check
    _
  $region15: #{tpu_custom_call.1} parent=0 // pred_check_branch
    %58 = sbr.rel (0) target = $region17
  $region16: #{tpu_custom_call.1} parent=0 // pred_region
    _
  $region17: #{tpu_custom_call.1} parent=0 // pred_fallthru
    _
  // Predicated region
  $region18: #{tpu_custom_call.1} parent=0 // pred_check
    _
  $region19: #{tpu_custom_call.1} parent=0 // pred_check_branch
    %60 = sbr.rel (0) target = $region21
  $region20: #{tpu_custom_call.1} parent=0 // pred_region
    _
  $region21: #{tpu_custom_call.1} parent=0 // pred_fallthru
    _

</llo_original>
